<compile_context>
chip_gen: v7x
topology: tpu7x:2x2x1
jax: 0.10.0
libtpu: 0.0.40
codegen_flags: <defaults>
</compile_context>

<pallas_src>
import numpy as np
import jax
import jax.numpy as jnp
from jax.experimental import pallas as pl
from jax.experimental.pallas import tpu as pltpu

LANE = 128  # TPU lane width


# ----------------------------------------------------------------------------
# Pallas kernel: sublane-axis reduction over a packed connection table.
#   c_ref: [K, P_tile] int32  (K neighbors on sublanes, points on lanes)
#   o_ref: [1, P_tile] int32  (lane-dense output -> full-width stores)
# ----------------------------------------------------------------------------
def _colsum_kernel(c_ref, o_ref):
    o_ref[...] = jnp.sum(c_ref[...], axis=0, keepdims=True)


def packed_connection_rowsums(conn_kp, *, tile_p=512):
    """Per-point neighbor-index sums for a packed [K, P] connection table.

    conn_kp: int32 [K, P] — every layer's [P_l, K] connection matrix
    transposed and concatenated along the point (lane) axis, zero-padded to a
    multiple of 128.  Returns int32 [1, P] (exact integer sums).
    """
    conn_kp = jnp.asarray(conn_kp, dtype=jnp.int32)
    K, P = conn_kp.shape
    out_shape = jax.ShapeDtypeStruct((1, P), jnp.int32)

    if P <= tile_p or P % tile_p != 0:
        # Small/irregular case: whole table is a single VMEM block — no grid,
        # no software-pipeline prologue/epilogue.
        return pl.pallas_call(
            _colsum_kernel,
            out_shape=out_shape,
            in_specs=[pl.BlockSpec(memory_space=pltpu.MemorySpace.VMEM)],
            out_specs=pl.BlockSpec(memory_space=pltpu.MemorySpace.VMEM),
        )(conn_kp)

    # Mesh-scale case: tile the point (lane) axis; blocks are (K, tile_p) with
    # K equal to the full first dim and tile_p a multiple of 128, so the
    # (8,128) BlockSpec rule is satisfied.  "parallel" lets v7x shard rows
    # across its 2 TensorCores.
    return pl.pallas_call(
        _colsum_kernel,
        out_shape=out_shape,
        grid=(P // tile_p,),
        in_specs=[pl.BlockSpec((K, tile_p), lambda i: (0, i))],
        out_specs=pl.BlockSpec((1, tile_p), lambda i: (0, i)),
        compiler_params=pltpu.CompilerParams(
            dimension_semantics=("parallel",)),
    )(conn_kp)


# ----------------------------------------------------------------------------
# JAX re-implementation of MCStructure.
# ----------------------------------------------------------------------------
class MCStructure:
    def __init__(self, channel_lst, connection_layer, inptnr, weight_num,
                 bDec=True, b_perpoint_bias=True, *, key=None, neighbor_k=10):
        self.point_num = inptnr
        self.residual_rate = 0.9
        self.b_max_pool = 0
        self.perpoint_bias = b_perpoint_bias

        # TODO(synk): the original __init__ does os.listdir()/np.load() on
        # '../../MeshConvolution/flame/ConnectionMatrices/'.  File I/O is not
        # reproducible here, so the [out_point_num, K] integer neighbor tables
        # are synthesized deterministically instead (same structural role;
        # out_point_num halves per layer).
        if key is None:
            key = jax.random.PRNGKey(0)

        self.connection_layer_fn_lst = [
            'synthetic_' + name for name in connection_layer]
        self.layer_num = len(self.connection_layer_fn_lst)

        self.ptnum_list = [inptnr]
        self.connection_info_lsts = []
        pt = inptnr
        for _ in range(self.layer_num):
            out_point_num = max(pt // 2, 1)
            key, sub = jax.random.split(key)
            connection_info = jax.random.randint(
                sub, (out_point_num, neighbor_k), 0, pt, dtype=jnp.int32)
            self.connection_info_lsts.append(np.asarray(connection_info))
            self.ptnum_list.append(out_point_num)
            pt = out_point_num

        # Pack all layers once, host-side, into a single lane-dense
        # [K, P_total_padded] int32 slab (K on sublanes, points on lanes).
        self.layer_offsets = []          # (start_col, num_points) per layer
        cols = []
        off = 0
        for conn in self.connection_info_lsts:
            p_l = conn.shape[0]
            self.layer_offsets.append((off, p_l))
            cols.append(conn.T)          # [K, P_l]
            off += p_l
        p_total = off
        p_pad = -(-max(p_total, 1) // LANE) * LANE
        packed = np.zeros((neighbor_k, p_pad), dtype=np.int32)
        if p_total > 0:
            packed[:, :p_total] = np.concatenate(cols, axis=1)
        self.packed_conn = packed        # [K, p_pad] int32

    def forward(self):
        # Exact semantics of the PyTorch module: no compute, returns None.
        return


if __name__ == "__main__":
    key = jax.random.PRNGKey(0)

    # Small shapes consistent with the module: 16 input mesh points,
    # two "connection layers" (16 -> 8 -> 4 points), K = 10 neighbors.
    channel_lst = [4, 8, 16]
    connection_layer = ["pool1", "pool2"]
    inptnr = 16
    weight_num = 9

    mc = MCStructure(channel_lst, connection_layer, inptnr, weight_num,
                     bDec=True, b_perpoint_bias=True, key=key)

    # Forward pass: exactly as in PyTorch, returns None.
    out = mc.forward()
    assert out is None
    assert mc.ptnum_list == [16, 8, 4]

    # --- Fused path: ONE Pallas launch covers every layer's matrix ----------
    sums = packed_connection_rowsums(mc.packed_conn)
    sums = np.asarray(jax.block_until_ready(sums))[0]        # [P_padded]

    for conn, (off, p_l) in zip(mc.connection_info_lsts, mc.layer_offsets):
        ref = np.asarray(conn, dtype=np.int64).sum(axis=1)
        np.testing.assert_array_equal(sums[off:off + p_l].astype(np.int64), ref)

    # --- Tiled "parallel" path at a larger, mesh-scale-ish size -------------
    key, sub = jax.random.split(key)
    big = jax.random.randint(sub, (10, 1024), 0, 4096, dtype=jnp.int32)
    big_sums = packed_connection_rowsums(big, tile_p=256)
    big_sums = np.asarray(jax.block_until_ready(big_sums))[0]
    np.testing.assert_array_equal(
        big_sums.astype(np.int64),
        np.asarray(big, dtype=np.int64).sum(axis=0))

    print("KERNEL_OK")
</pallas_src>

<mosaic_0001>
module attributes {stable_mosaic.version = 11 : i64} {
  func.func @_colsum_kernel(%arg0: memref<10x128xi32, #tpu.memory_space<vmem>>, %arg1: memref<1x128xi32, #tpu.memory_space<vmem>>) attributes {dimension_semantics = [], scalar_prefetch = 0 : i64, scratch_operands = 0 : i64, tpu.core_type = #tpu.core_type<tc>} {
    %c0 = arith.constant 0 : index
    %c0_0 = arith.constant 0 : index
    %0 = vector.load %arg0[%c0, %c0_0] : memref<10x128xi32, #tpu.memory_space<vmem>>, vector<10x128xi32>
    %cst = arith.constant dense<0> : vector<128xi32>
    %1 = vector.multi_reduction <add>, %0, %cst [0] : vector<10x128xi32> to vector<128xi32>
    %2 = vector.shape_cast %1 : vector<128xi32> to vector<1x128xi32>
    %c0_1 = arith.constant 0 : index
    %c0_2 = arith.constant 0 : index
    %3 = vector.load %arg1[%c0_1, %c0_2] : memref<1x128xi32, #tpu.memory_space<vmem>>, vector<1x128xi32>
    tpu.vector_store %arg1[%c0_1, %c0_2], %2 {strides = array<i32>} : memref<1x128xi32, #tpu.memory_space<vmem>>, vector<1x128xi32>,
    return
  }
}

</mosaic_0001>

<llo_original>
// kernel: tpu_custom_call.1
$region0: #{tpu_custom_call.1}
  #allocation0 [shape = 'u32[]', space=smem, size = 0x4, offset = 0x4, fixed_abs, tag = 'smem constant byte address 0x4 - core index']
  #allocation1 [shape = 'u32[144,128]{1,0:T(1,128)}', space=vmem, size = 0x12000, scoped, tag = 'internal scratch']
  %s0 = inlined_call_operand.hbm [shape: s32[10,128], index: 0, kind: input, shape index: {}]
  %s1 = inlined_call_operand.hbm [shape: s32[1,128], index: 1, kind: output, shape index: {}]
  %s2 = sld [smem:[#allocation0]]
  $region18: #{tpu_custom_call.1} parent=0
    _
  %s4 = ssub.s32 1, %s2
  %s5 = scalar_select 0, %s4, %s2
  $region1: #{tpu_custom_call.1} parent=0
    #allocation2 [shape = 'u8[8192]{0}', space=vmem, size = 0x2000, scoped, tag = 'input window, operand 0, single buffered']
    #allocation3 [shape = 's32[1]{0}', space=sflag, size = 0x4, scoped, tag = 'scoped memory for tpu_custom_call.1']
    #allocation4 [shape = 's32[1]{0}', space=sflag, size = 0x4, scoped, tag = 'scoped memory for tpu_custom_call.1']
    #allocation5 [shape = 'u8[512]{0}', space=vmem, size = 0x400, scoped, tag = 'output window, operand 0, single buffered']
    %6 = vsyncpa [#allocation3], 0
    %7 = vsyncpa [#allocation4], 0
    // Predicated region
    $region2: #{tpu_custom_call.1} parent=1 // pred_check
      _
    $region3: #{tpu_custom_call.1} parent=1 // pred_check_branch
      %9 = sbr.rel (0) target = $region5
    $region4: #{tpu_custom_call.1} parent=1 // pred_region
      %s11 = ssub.s32 256, 256
      %12 = vsyncadd [#allocation3], %s11
      %s13 = sshll.u32 [#allocation2], 4
      %s14 = int_to_ptr.vmem [resolvable:$true] %s13
      %19 = dma.hbm_to_vmem [thread:$0]  %s0, 256, %s14, [#allocation3], 128, 128, 8
    $region5: #{tpu_custom_call.1} parent=1 // pred_fallthru
      _
    // Predicated region
    $region6: #{tpu_custom_call.1} parent=1 // pred_check
      _
    $region7: #{tpu_custom_call.1} parent=1 // pred_check_branch
      %21 = sbr.rel (0) target = $region9
    $region8: #{tpu_custom_call.1} parent=1 // pred_region
      %22 = dma.done [#allocation3], 256
    $region9: #{tpu_custom_call.1} parent=1 // pred_fallthru
      _
    %v23 = vld [vmem:[#allocation2] sm:$0xff]
    %v24 = vld [vmem:[#allocation2 + $0x8] sm:$0x3]
    %vm25 = vcmask 1041408
    %v26 = vsel %vm25, %v24, 0
    %v27 = vadd.s32 %v23, %v26
    %v28 = vrot.slane %v27, 4
    %v29 = vadd.s32 %v27, %v28
    %v30 = vrot.slane %v29, 2
    %v31 = vadd.s32 %v29, %v30
    %v32 = vrot.slane %v31, 1
    %v33 = vadd.s32 %v31, %v32
    %34 = vst [vmem:[#allocation5] sm:$0x1] %v33
    // Predicated region
    $region10: #{tpu_custom_call.1} parent=1 // pred_check
      _
    $region11: #{tpu_custom_call.1} parent=1 // pred_check_branch
      %36 = sbr.rel (0) target = $region13
    $region12: #{tpu_custom_call.1} parent=1 // pred_region
      %s38 = ssub.s32 16, 16
      %39 = vsyncadd [#allocation4], %s38
      %s41 = sshll.u32 [#allocation5], 4
      %s42 = int_to_ptr.vmem [resolvable:$true] %s41
      %44 = dma.vmem_to_hbm [thread:$0]  %s42, 16, %s1, [#allocation4]
    $region13: #{tpu_custom_call.1} parent=1 // pred_fallthru
      _
    // Predicated region
    $region14: #{tpu_custom_call.1} parent=1 // pred_check
      _
    $region15: #{tpu_custom_call.1} parent=1 // pred_check_branch
      %46 = sbr.rel (0) target = $region17
    $region16: #{tpu_custom_call.1} parent=1 // pred_region
      %47 = dma.done [#allocation4], 16
    $region17: #{tpu_custom_call.1} parent=1 // pred_fallthru
      _
    %48 = vsyncpa [#allocation3], 1
    %49 = vsyncpa [#allocation4], 1

</llo_original>
